<compile_context>
chip_gen: v7x
topology: tpu7x:2x2x1
jax: 0.10.0
libtpu: 0.0.40
codegen_flags: <defaults>
</compile_context>

<pallas_src>
import math
import jax
import jax.numpy as jnp
from jax.experimental import pallas as pl
from jax.experimental.pallas import tpu as pltpu


def _round_up(x, m):
    return ((x + m - 1) // m) * m


# --------------------- Kernel A: support = X @ W (row-tiled) ---------------------
def support_kernel(x_ref, w_ref, o_ref):
    o_ref[...] = jnp.dot(
        x_ref[...], w_ref[...], preferred_element_type=jnp.float32
    ).astype(o_ref.dtype)


# ------------- Kernel B: out = adj @ support (+ bias), i x k tiled ---------------
def spmm_kernel(adj_ref, s_ref, o_ref, acc_ref):
    k = pl.program_id(1)

    @pl.when(k == 0)
    def _():
        acc_ref[...] = jnp.zeros_like(acc_ref)

    acc_ref[...] += jnp.dot(
        adj_ref[...], s_ref[...], preferred_element_type=jnp.float32
    )

    @pl.when(k == pl.num_programs(1) - 1)
    def _():
        o_ref[...] = acc_ref[...].astype(o_ref.dtype)


def spmm_bias_kernel(adj_ref, s_ref, b_ref, o_ref, acc_ref):
    k = pl.program_id(1)

    @pl.when(k == 0)
    def _():
        acc_ref[...] = jnp.zeros_like(acc_ref)

    acc_ref[...] += jnp.dot(
        adj_ref[...], s_ref[...], preferred_element_type=jnp.float32
    )

    @pl.when(k == pl.num_programs(1) - 1)
    def _():
        # Bias add only on the final k step (b_ref is [1, F_pad], broadcasts).
        o_ref[...] = (acc_ref[...] + b_ref[...]).astype(o_ref.dtype)


def graph_convolution(x, adj, weight, bias=None, *, tile=512, adj_dtype=None):
    """Pallas GCN layer: adj @ (x @ weight) + bias.

    adj_dtype: optionally stream adj / support in a narrower dtype (e.g.
    jnp.bfloat16) for ~2x effective HBM bandwidth; accumulation stays f32.
    """
    n, f_in = x.shape
    f_out = weight.shape[1]
    assert adj.shape == (n, n)
    assert weight.shape == (f_in, f_out)

    out_dtype = x.dtype
    f32 = jnp.float32

    # Lane-dense output: pad F_out to a multiple of 128 (unmasked vst, full MXU cols).
    f_pad = _round_up(f_out, 128)

    # Row / contraction tile sizes for adj @ support.
    if n <= tile:
        n_pad = _round_up(n, 8)          # single full-dim tile, sublane aligned
        tm = tk = n_pad
    else:
        n_pad = _round_up(n, tile)       # 512-aligned tiles, VMEM-friendly on all gens
        tm = tk = tile

    # Zero-pad operands (padding rows/cols are zeros -> no effect after slicing).
    x_p = jnp.zeros((n_pad, f_in), f32).at[:n, :].set(x.astype(f32))
    w_p = jnp.zeros((f_in, f_pad), f32).at[:, :f_out].set(weight.astype(f32))
    adj_p = jnp.zeros((n_pad, n_pad), f32).at[:n, :n].set(adj.astype(f32))
    if adj_dtype is not None:
        adj_p = adj_p.astype(adj_dtype)

    # ---- Kernel A: support = X @ W, computed once (not per adj row tile) ----
    support = pl.pallas_call(
        support_kernel,
        out_shape=jax.ShapeDtypeStruct((n_pad, f_pad), f32),
        grid=(n_pad // tm,),
        in_specs=[
            pl.BlockSpec((tm, f_in), lambda i: (i, 0)),      # x row tile
            pl.BlockSpec((f_in, f_pad), lambda i: (0, 0)),   # weight resident
        ],
        out_specs=pl.BlockSpec((tm, f_pad), lambda i: (i, 0)),
        compiler_params=pltpu.CompilerParams(
            dimension_semantics=("parallel",),
        ),
        cost_estimate=pl.CostEstimate(
            flops=2 * n_pad * f_in * f_pad,
            bytes_accessed=4 * (n_pad * f_in + f_in * f_pad + n_pad * f_pad),
            transcendentals=0,
        ),
    )(x_p, w_p)

    support_in = support if adj_dtype is None else support.astype(adj_dtype)

    # ---- Kernel B: out = adj @ support (+ bias), tiled over rows (i) and k ----
    grid = (n_pad // tm, n_pad // tk)
    adj_spec = pl.BlockSpec((tm, tk), lambda i, k: (i, k))
    sup_spec = pl.BlockSpec((tk, f_pad), lambda i, k: (k, 0))
    out_spec = pl.BlockSpec((tm, f_pad), lambda i, k: (i, 0))
    scratch = [pltpu.VMEM((tm, f_pad), jnp.float32)]
    params = pltpu.CompilerParams(
        dimension_semantics=("parallel", "arbitrary"),
    )
    cost = pl.CostEstimate(
        flops=2 * n_pad * n_pad * f_pad,
        bytes_accessed=(
            adj_p.dtype.itemsize * n_pad * n_pad
            + support_in.dtype.itemsize * n_pad * f_pad
            + 4 * n_pad * f_pad
        ),
        transcendentals=0,
    )

    if bias is None:
        out_p = pl.pallas_call(
            spmm_kernel,
            out_shape=jax.ShapeDtypeStruct((n_pad, f_pad), out_dtype),
            grid=grid,
            in_specs=[adj_spec, sup_spec],
            out_specs=out_spec,
            scratch_shapes=scratch,
            compiler_params=params,
            cost_estimate=cost,
        )(adj_p, support_in)
    else:
        b_p = jnp.zeros((1, f_pad), f32).at[0, :f_out].set(bias.astype(f32))
        out_p = pl.pallas_call(
            spmm_bias_kernel,
            out_shape=jax.ShapeDtypeStruct((n_pad, f_pad), out_dtype),
            grid=grid,
            in_specs=[
                adj_spec,
                sup_spec,
                pl.BlockSpec((1, f_pad), lambda i, k: (0, 0)),   # bias resident
            ],
            out_specs=out_spec,
            scratch_shapes=scratch,
            compiler_params=params,
            cost_estimate=cost,
        )(adj_p, support_in, b_p)

    return out_p[:n, :f_out]


if __name__ == "__main__":
    # Small, module-consistent shapes: N nodes, in_features -> out_features.
    N, IN_FEATURES, OUT_FEATURES = 64, 32, 16

    key = jax.random.PRNGKey(0)
    k_x, k_adj, k_w, k_b = jax.random.split(key, 4)

    # Deterministic parameter init mirroring reset_parameters():
    # uniform(-stdv, stdv) with stdv = 1 / sqrt(out_features)
    stdv = 1.0 / math.sqrt(OUT_FEATURES)
    weight = jax.random.uniform(
        k_w, (IN_FEATURES, OUT_FEATURES), dtype=jnp.float32,
        minval=-stdv, maxval=stdv)
    bias = jax.random.uniform(
        k_b, (OUT_FEATURES,), dtype=jnp.float32, minval=-stdv, maxval=stdv)

    # Example node features and a (symmetric, self-looped, row-normalized) adjacency.
    x = jax.random.normal(k_x, (N, IN_FEATURES), dtype=jnp.float32)
    a_rand = jax.random.uniform(k_adj, (N, N), dtype=jnp.float32)
    a_bin = (a_rand > 0.9).astype(jnp.float32)
    a_sym = jnp.maximum(a_bin, a_bin.T) + jnp.eye(N, dtype=jnp.float32)
    deg = jnp.sum(a_sym, axis=1, keepdims=True)
    adj = a_sym / deg  # row-normalized dense adjacency

    out = graph_convolution(x, adj, weight, bias)
    out = jax.block_until_ready(out)

    # Reference check in plain JAX (same math as the PyTorch forward).
    ref = adj @ (x @ weight) + bias
    assert out.shape == (N, OUT_FEATURES)
    assert jnp.allclose(out, ref, atol=1e-5, rtol=1e-5)

    # Also exercise the bias=None path (separate kernel variant, no bias DMA).
    out_nb = jax.block_until_ready(graph_convolution(x, adj, weight, None))
    ref_nb = adj @ (x @ weight)
    assert jnp.allclose(out_nb, ref_nb, atol=1e-5, rtol=1e-5)

    print("KERNEL_OK")
</pallas_src>

<mosaic_0001>
module attributes {stable_mosaic.version = 11 : i64} {
  func.func @support_kernel(%arg0: i32, %arg1: memref<64x32xf32, #tpu.memory_space<vmem>>, %arg2: memref<32x128xf32, #tpu.memory_space<vmem>>, %arg3: memref<64x128xf32, #tpu.memory_space<vmem>>) attributes {dimension_semantics = [#tpu.dimension_semantics<parallel>], iteration_bounds = array<i64: 1>, scalar_prefetch = 0 : i64, scratch_operands = 0 : i64, tpu.core_type = #tpu.core_type<tc>, window_params = [{transform_indices = @transform_0, window_bounds = array<i64: 64, 32>}, {pipeline_mode = #tpu.pipeline_mode<synchronous>, transform_indices = @transform_1, window_bounds = array<i64: 32, 128>}, {transform_indices = @transform_2, window_bounds = array<i64: 64, 128>}]} {
    %c0 = arith.constant 0 : index
    %c0_0 = arith.constant 0 : index
    %0 = vector.load %arg1[%c0, %c0_0] : memref<64x32xf32, #tpu.memory_space<vmem>>, vector<64x32xf32>
    %c0_1 = arith.constant 0 : index
    %c0_2 = arith.constant 0 : index
    %1 = vector.load %arg2[%c0_1, %c0_2] : memref<32x128xf32, #tpu.memory_space<vmem>>, vector<32x128xf32>
    %cst = arith.constant dense<0.000000e+00> : vector<64x128xf32>
    %2 = tpu.matmul %0, %1, %cst {dimension_numbers = #tpu.dot_dimension_numbers<[1], [0], [0], [1], [0, 0, 1, 1], [], []>} : vector<64x32xf32>, vector<32x128xf32>, vector<64x128xf32> -> vector<64x128xf32>
    %c0_3 = arith.constant 0 : index
    %c0_4 = arith.constant 0 : index
    %3 = vector.load %arg3[%c0_3, %c0_4] : memref<64x128xf32, #tpu.memory_space<vmem>>, vector<64x128xf32>
    tpu.vector_store %arg3[%c0_3, %c0_4], %2 {strides = array<i32>} : memref<64x128xf32, #tpu.memory_space<vmem>>, vector<64x128xf32>,
    return
  }
  func.func @transform_0(%arg0: i32) -> (i32, i32) {
    %c0_i32 = arith.constant 0 : i32
    %c0_i32_0 = arith.constant 0 : i32
    return %arg0, %c0_i32 : i32, i32
  }
  func.func @transform_1(%arg0: i32) -> (i32, i32) {
    %c0_i32 = arith.constant 0 : i32
    %c0_i32_0 = arith.constant 0 : i32
    %c0_i32_1 = arith.constant 0 : i32
    return %c0_i32, %c0_i32_0 : i32, i32
  }
  func.func @transform_2(%arg0: i32) -> (i32, i32) {
    %c0_i32 = arith.constant 0 : i32
    %c0_i32_0 = arith.constant 0 : i32
    return %arg0, %c0_i32 : i32, i32
  }
}

</mosaic_0001>

<llo_original>
// kernel: tpu_custom_call.1
$region0: #{tpu_custom_call.1}
  #allocation0 [shape = 'u32[]', space=smem, size = 0x4, offset = 0x4, fixed_abs, tag = 'smem constant byte address 0x4 - core index']
  #allocation1 [shape = 'u32[144,128]{1,0:T(1,128)}', space=vmem, size = 0x12000, scoped, tag = 'internal scratch']
  %s0 = inlined_call_operand.vmem [shape: f32[64,32], index: 0, kind: input, shape index: {}]
  %s1 = inlined_call_operand.vmem [shape: f32[32,128], index: 1, kind: input, shape index: {}]
  %s2 = inlined_call_operand.hbm [shape: f32[64,128], index: 2, kind: output, shape index: {}]
  %s3 = sld [smem:[#allocation0]]
  $region18: #{tpu_custom_call.1} parent=0
    _
  %s5 = ssub.s32 1, %s3
  %s6 = scalar_select 0, %s5, %s3
  $region1: #{tpu_custom_call.1} parent=0
    #allocation2 [shape = 'u8[32768]{0}', space=vmem, size = 0x8000, scoped, tag = 'output window, operand 0, single buffered']
    #allocation3 [shape = 's32[1]{0}', space=sflag, size = 0x4, scoped, tag = 'scoped memory for tpu_custom_call.1']
    %7 = vsyncpa [#allocation3], 0
    // Predicated region
    $region2: #{tpu_custom_call.1} parent=1 // pred_check
      _
    $region3: #{tpu_custom_call.1} parent=1 // pred_check_branch
      %9 = sbr.rel (0) target = $region5
    $region4: #{tpu_custom_call.1} parent=1 // pred_region
      _
    $region5: #{tpu_custom_call.1} parent=1 // pred_fallthru
      _
    // Predicated region
    $region6: #{tpu_custom_call.1} parent=1 // pred_check
      _
    $region7: #{tpu_custom_call.1} parent=1 // pred_check_branch
      %11 = sbr.rel (0) target = $region9
    $region8: #{tpu_custom_call.1} parent=1 // pred_region
      _
    $region9: #{tpu_custom_call.1} parent=1 // pred_fallthru
      _
    %v12 = vld [vmem:[%s0] sm:$0xff]
    %v13 = vld [vmem:[%s0 + $0x8] sm:$0xff]
    %v14 = vld [vmem:[%s0 + $0x10] sm:$0xff]
    %v15 = vld [vmem:[%s0 + $0x18] sm:$0xff]
    %v16 = vld [vmem:[%s0 + $0x20] sm:$0xff]
    %v17 = vld [vmem:[%s0 + $0x28] sm:$0xff]
    %v18 = vld [vmem:[%s0 + $0x30] sm:$0xff]
    %v19 = vld [vmem:[%s0 + $0x38] sm:$0xff]
    %v20 = vld [vmem:[%s1] sm:$0xff]
    %v21 = vld [vmem:[%s1 + $0x8] sm:$0xff]
    %v22 = vld [vmem:[%s1 + $0x10] sm:$0xff]
    %v23 = vld [vmem:[%s1 + $0x18] sm:$0xff]
    %vm24 = vcmask 261120
    %v26 = vsel %vm24, %v12, 0
    %v29 = vsel %vm24, %v13, 0
    %v32 = vsel %vm24, %v14, 0
    %v35 = vsel %vm24, %v15, 0
    %v38 = vsel %vm24, %v16, 0
    %v41 = vsel %vm24, %v17, 0
    %v44 = vsel %vm24, %v18, 0
    %v47 = vsel %vm24, %v19, 0
    %49 = vmatprep.subr.mxu0 0.0
    %50 = vmatpush1.msra.mxu0 %v20
    %51 = vmatprep.subr.mxu0 0.0
    %52 = vmatpush1.msra.mxu0 %v21
    %53 = vmatprep.subr.mxu0 0.0
    %54 = vmatpush1.msra.mxu0 %v22
    %55 = vmatprep.subr.mxu0 0.0
    %56 = vmatpush1.msra.mxu0 %v23
    %57 = vmatprep.subr.mxu0 0.0
    %58 = vmatpush1.msra.mxu0 0.0
    %59 = vmatprep.subr.mxu0 0.0
    %60 = vmatpush1.msra.mxu0 0.0
    %61 = vmatprep.subr.mxu0 0.0
    %62 = vmatpush1.msra.mxu0 0.0
    %63 = vmatprep.subr.mxu0 0.0
    %64 = vmatpush1.msra.mxu0 0.0
    %65 = vmatprep.subr.mxu0 0.0
    %66 = vmatpush1.msra.mxu0 0.0
    %67 = vmatprep.subr.mxu0 0.0
    %68 = vmatpush1.msra.mxu0 0.0
    %69 = vmatprep.subr.mxu0 0.0
    %70 = vmatpush1.msra.mxu0 0.0
    %71 = vmatprep.subr.mxu0 0.0
    %72 = vmatpush1.msra.mxu0 0.0
    %73 = vmatprep.subr.mxu0 0.0
    %74 = vmatpush1.msra.mxu0 0.0
    %75 = vmatprep.subr.mxu0 0.0
    %76 = vmatpush1.msra.mxu0 0.0
    %77 = vmatprep.subr.mxu0 0.0
    %78 = vmatpush1.msra.mxu0 0.0
    %79 = vmatprep.subr.mxu0 0.0
    %80 = vmatpush1.msra.mxu0 0.0
    %81 = vmatprep.subr.mxu0 0.0
    %82 = vmatpush1.msra.mxu0 0.0
    %83 = vmatprep.subr.mxu0 0.0
    %84 = vmatpush1.msra.mxu0 0.0
    %85 = vmatprep.subr.mxu0 0.0
    %86 = vmatpush1.msra.mxu0 0.0
    %87 = vmatprep.subr.mxu0 0.0
    %88 = vmatpush1.msra.mxu0 0.0
    %89 = vmatprep.subr.mxu0 0.0
    %90 = vmatpush1.msra.mxu0 0.0
    %91 = vmatprep.subr.mxu0 0.0
    %92 = vmatpush1.msra.mxu0 0.0
    %93 = vmatprep.subr.mxu0 0.0
    %94 = vmatpush1.msra.mxu0 0.0
    %95 = vmatprep.subr.mxu0 0.0
    %96 = vmatpush1.msra.mxu0 0.0
    %97 = vmatprep.subr.mxu0 0.0
    %98 = vmatpush1.msra.mxu0 0.0
    %99 = vmatprep.subr.mxu0 0.0
    %100 = vmatpush1.msra.mxu0 0.0
    %101 = vmatprep.subr.mxu0 0.0
    %102 = vmatpush1.msra.mxu0 0.0
    %103 = vmatprep.subr.mxu0 0.0
    %104 = vmatpush1.msra.mxu0 0.0
    %105 = vmatprep.subr.mxu0 0.0
    %106 = vmatpush1.msra.mxu0 0.0
    %107 = vmatprep.subr.mxu0 0.0
    %108 = vmatpush1.msra.mxu0 0.0
    %109 = vmatprep.subr.mxu0 0.0
    %110 = vmatpush1.msra.mxu0 0.0
    %111 = vmatprep.subr.mxu0 0.0
    %112 = vmatpush1.msra.mxu0 0.0
    %113 = vmatprep.mubr.f32.mxu0 0.0
    %114 = vmatmul.mubr.f32.gmra.mrb[0].mxu0 %v26
    %v115 = vpop.f32.mrb[0].mxu0
    %v116 = vadd.f32 0.0, %v115
    %v117 = vpop.f32.mrb[0].mxu0
    %118 = vmatprep.mubr.f32.mxu0 0.0
    %119 = vmatmul.mubr.f32.gmra.mrb[0].mxu0 %v29
    %v120 = vpop.f32.mrb[0].mxu0
    %v121 = vadd.f32 0.0, %v120
    %v122 = vpop.f32.mrb[0].mxu0
    %123 = vmatprep.mubr.f32.mxu0 0.0
    %124 = vmatmul.mubr.f32.gmra.mrb[0].mxu0 %v32
    %v125 = vpop.f32.mrb[0].mxu0
    %v126 = vadd.f32 0.0, %v125
    %v127 = vpop.f32.mrb[0].mxu0
    %128 = vmatprep.mubr.f32.mxu0 0.0
    %129 = vmatmul.mubr.f32.gmra.mrb[0].mxu0 %v35
    %v130 = vpop.f32.mrb[0].mxu0
    %v131 = vadd.f32 0.0, %v130
    %v132 = vpop.f32.mrb[0].mxu0
    %133 = vmatprep.mubr.f32.mxu0 0.0
    %134 = vmatmul.mubr.f32.gmra.mrb[0].mxu0 %v38
    %v135 = vpop.f32.mrb[0].mxu0
    %v136 = vadd.f32 0.0, %v135
    %v137 = vpop.f32.mrb[0].mxu0
    %138 = vmatprep.mubr.f32.mxu0 0.0
    %139 = vmatmul.mubr.f32.gmra.mrb[0].mxu0 %v41
    %v140 = vpop.f32.mrb[0].mxu0
    %v141 = vadd.f32 0.0, %v140
    %v142 = vpop.f32.mrb[0].mxu0
    %143 = vmatprep.mubr.f32.mxu0 0.0
    %144 = vmatmul.mubr.f32.gmra.mrb[0].mxu0 %v44
    %v145 = vpop.f32.mrb[0].mxu0
    %v146 = vadd.f32 0.0, %v145
    %v147 = vpop.f32.mrb[0].mxu0
    %148 = vmatprep.mubr.f32.mxu0 0.0
    %149 = vmatmul.mubr.f32.gmra.mrb[0].mxu0 %v47
    %v150 = vpop.f32.mrb[0].mxu0
    %v151 = vadd.f32 0.0, %v150
    %v152 = vpop.f32.mrb[0].mxu0
    %153 = vdwg.mxu0
    %154 = vst [vmem:[#allocation2] sm:$0xff] %v116
    %155 = vst [vmem:[#allocation2 + $0x8] sm:$0xff] %v121
    %156 = vst [vmem:[#allocation2 + $0x10] sm:$0xff] %v126
    %157 = vst [vmem:[#allocation2 + $0x18] sm:$0xff] %v131
    %158 = vst [vmem:[#allocation2 + $0x20] sm:$0xff] %v136
    %159 = vst [vmem:[#allocation2 + $0x28] sm:$0xff] %v141
    %160 = vst [vmem:[#allocation2 + $0x30] sm:$0xff] %v146
    %161 = vst [vmem:[#allocation2 + $0x38] sm:$0xff] %v151
    // Predicated region
    $region10: #{tpu_custom_call.1} parent=1 // pred_check
      _
    $region11: #{tpu_custom_call.1} parent=1 // pred_check_branch
      %163 = sbr.rel (0) target = $region13
    $region12: #{tpu_custom_call.1} parent=1 // pred_region
      %s165 = ssub.s32 1024, 1024
      %166 = vsyncadd [#allocation3], %s165
      %s167 = sshll.u32 [#allocation2], 4
      %s168 = int_to_ptr.vmem [resolvable:$true] %s167
      %173 = dma.vmem_to_hbm [thread:$0]  %s168, 1024, %s2, [#allocation3], 128, 128, 8
    $region13: #{tpu_custom_call.1} parent=1 // pred_fallthru
      _
    // Predicated region
    $region14: #{tpu_custom_call.1} parent=1 // pred_check
      _
    $region15: #{tpu_custom_call.1} parent=1 // pred_check_branch
      %175 = sbr.rel (0) target = $region17
    $region16: #{tpu_custom_call.1} parent=1 // pred_region
      %176 = dma.done [#allocation3], 1024
    $region17: #{tpu_custom_call.1} parent=1 // pred_fallthru
      _
    %177 = vsyncpa [#allocation3], 1

</llo_original>
